<compile_context>
chip_gen: v6e
topology: v6e:2x2x1
jax: 0.10.0
libtpu: 0.0.40
codegen_flags: <defaults>
</compile_context>

<pallas_src>
import functools

import jax
import jax.numpy as jnp
from jax.experimental import pallas as pl
from jax.experimental.pallas import tpu as pltpu

MASKING_VALUE = -10000000000.0   # torch float32 branch; scores are f32 in-kernel


@functools.lru_cache(maxsize=8)
def _make_kernel(use_mask: bool, valid_s):
    """valid_s: true S when the sequence block was rounded up and there is no
    user mask to cover the padded tail; otherwise None."""

    def kernel(*refs):
        if use_mask:
            emb_ref, w_ref, b_ref, wq_ref, mask_ref, out_ref = refs
        else:
            emb_ref, w_ref, b_ref, wq_ref, out_ref = refs
            mask_ref = None

        bb, s_pad, d = emb_ref.shape                       # (BB, Sp, D) block
        a = w_ref.shape[1]

        emb = emb_ref[...]                                  # native dtype (BB, Sp, D)

        # ---- projection + tanh: the only MXU matmul, dense over all BB*Sp rows ----
        proj = jnp.dot(emb.reshape(bb * s_pad, d), w_ref[...],
                       preferred_element_type=jnp.float32)  # (BB*Sp, A) f32
        h = jnp.tanh(proj + b_ref[...])                     # (BB*Sp, A) f32

        # ---- additive query on the VPU: multiply by w_q, lane-reduce over A ----
        g = h * wq_ref[...]                                  # (BB*Sp, A) f32
        scores = jnp.sum(g.reshape(bb, s_pad, a), axis=-1)   # (BB, Sp) lane-dense

        if use_mask:
            scores = jnp.where(mask_ref[...] == 0.0, MASKING_VALUE, scores)
        elif valid_s is not None:
            # Padded tail of the sequence block (no user mask): mask in-kernel,
            # no mask tensor DMA.
            col = jax.lax.broadcasted_iota(jnp.int32, (bb, s_pad), 1)
            scores = jnp.where(col < valid_s, scores, MASKING_VALUE)

        # ---- softmax over S (lane axis); BB batch rows packed on sublanes ----
        m = jnp.max(scores, axis=-1, keepdims=True)           # (BB, 1)
        e = jnp.exp(scores - m)                                # (BB, Sp)
        denom = jnp.sum(e, axis=-1, keepdims=True)             # (BB, 1)
        attn = e * (1.0 / denom)                                # exact divide: BB elems

        # ---- weighted pooling on VPU/XLU: broadcast attn over D, reduce over S ----
        weighted = emb * attn[:, :, None]                       # promotes to f32
        out_ref[...] = jnp.sum(weighted, axis=1).astype(out_ref.dtype)   # (BB, D)

    return kernel


def _round_up(x, m):
    return ((x + m - 1) // m) * m


def _vmem_budget():
    """(bytes we plan tiles against, scoped-VMEM limit handed to Mosaic)."""
    cap = 64 * 1024 * 1024                         # conservative default (v7x per-TC)
    try:
        info = pltpu.get_tpu_info()
        cap = getattr(info, "vmem_capacity_bytes", None) or cap
    except Exception:
        pass
    budget = int(cap * 0.45)                       # tiles + f32 intermediates
    limit = min(int(cap * 0.70), 112 * 1024 * 1024)
    return budget, limit


def _choose_block_b(B, s_pad, D, A, emb_itemsize, budget_bytes):
    # Per batch-row VMEM cost of one grid step (intermediates included).
    per_row = (
        2 * s_pad * D * emb_itemsize      # double-buffered embeddings block
        + s_pad * D * 4                   # f32 weighted-pooling temporary
        + 2 * s_pad * A * 4               # proj + tanh(h) f32
        + 4 * s_pad * 4                   # scores / exp / attn (+ mask) tiles
        + 2 * D * 4                       # double-buffered output tile
    )
    bb = max(1, budget_bytes // per_row)
    bb = max(8, min(1024, (bb // 8) * 8))
    bb = min(bb, _round_up(B, 8))                  # don't over-pad tiny batches
    if B > 8:
        # Keep >= 2 grid steps: lets DMA of step i+1 overlap compute of step i
        # and gives both v7x TensorCores work on the "parallel" batch axis.
        bb = min(bb, max(8, _round_up(pl.cdiv(B, 2), 8)))
    return bb


def additive_attention(embeddings, W, bias, w_q, mask=None, *, block_b=None):
    """embeddings: (B, S, D); W: (D, A); bias: (A,); w_q: (A,); mask: (B, S) or None."""
    B, S, D = embeddings.shape
    A = W.shape[1]

    s_pad = _round_up(S, 8)

    emb = embeddings
    if s_pad != S:
        # TODO(synk): rare ragged-S corner (S % 8 != 0): a zero pad keeps the
        # in-kernel (BB*S, D) reshape sublane-aligned.  The common aligned
        # case pays no extra HBM pass.
        emb = jnp.pad(emb, ((0, 0), (0, s_pad - S), (0, 0)))

    use_mask = mask is not None
    # iota-mask only needed when S was rounded up and no user mask covers it
    valid_s = None if (s_pad == S or use_mask) else S

    budget, vmem_limit = _vmem_budget()
    if block_b is None:
        block_b = _choose_block_b(B, s_pad, D, A, embeddings.dtype.itemsize, budget)
    block_b = max(8, (block_b // 8) * 8)

    # Small per-call parameters.  The projection weight follows the embedding
    # dtype so bf16 inputs hit the bf16-native MXU path (f32 accumulation).
    w_arg = W.astype(embeddings.dtype)                        # (D, A)
    b_arg = bias.astype(jnp.float32).reshape(1, A)            # (1, A)
    wq_arg = w_q.astype(jnp.float32).reshape(1, A)            # (1, A)

    args = [emb, w_arg, b_arg, wq_arg]
    in_specs = [
        pl.BlockSpec((block_b, s_pad, D), lambda b: (b, 0, 0)),   # embeddings
        pl.BlockSpec((D, A), lambda b: (0, 0)),                   # projection weight
        pl.BlockSpec((1, A), lambda b: (0, 0)),                   # projection bias
        pl.BlockSpec((1, A), lambda b: (0, 0)),                   # w_q
    ]

    if use_mask:
        # Mask traffic is 1/D of the embedding traffic; ship it 2-D and
        # sublane/lane dense (BB rows on sublanes, S on lanes).
        m = mask.astype(jnp.float32)
        if s_pad != S:
            m = jnp.pad(m, ((0, 0), (0, s_pad - S)))              # pad positions -> masked
        args.append(m)
        in_specs.append(pl.BlockSpec((block_b, s_pad), lambda b: (b, 0)))

    out = pl.pallas_call(
        _make_kernel(use_mask, valid_s),
        out_shape=jax.ShapeDtypeStruct((B, D), embeddings.dtype),
        grid_spec=pltpu.PrefetchScalarGridSpec(
            num_scalar_prefetch=0,
            grid=(pl.cdiv(B, block_b),),              # partial edge block, no batch pad
            in_specs=in_specs,
            out_specs=pl.BlockSpec((block_b, D), lambda b: (b, 0)),
        ),
        compiler_params=pltpu.CompilerParams(
            dimension_semantics=("parallel",),        # v7x: shard batch over 2 TCs
            vmem_limit_bytes=vmem_limit,
        ),
    )(*args)

    return out


def additive_attention_ref(embeddings, W, bias, w_q, mask=None):
    emb = embeddings.astype(jnp.float32)
    proj = jnp.einsum("bsd,da->bsa", emb, W.astype(jnp.float32)) + bias.astype(jnp.float32)
    scores = jnp.einsum("bsa,a->bs", jnp.tanh(proj), w_q.astype(jnp.float32))
    if mask is not None:
        scores = jnp.where(mask == 0, MASKING_VALUE, scores)
    attn = jax.nn.softmax(scores, axis=1)
    return jnp.einsum("bi,bij->bj", attn, emb)


if __name__ == "__main__":
    B, S, D, A = 2, 8, 32, 16   # batch, seq, in_features, additive_dim

    key = jax.random.PRNGKey(0)
    k_emb, k_w, k_b, k_q, k_m = jax.random.split(key, 5)

    embeddings = jax.random.normal(k_emb, (B, S, D), dtype=jnp.float32)
    # nn.Linear(in_features=D, out_features=A): weight (A, D), bias (A,)
    W_t = jax.random.normal(k_w, (A, D), dtype=jnp.float32) * 0.1
    W = W_t.T                                   # (D, A) for x @ W
    bias = jax.random.normal(k_b, (A,), dtype=jnp.float32) * 0.1
    w_q = jax.random.normal(k_q, (A,), dtype=jnp.float32)
    mask = (jax.random.uniform(k_m, (B, S)) > 0.25).astype(jnp.float32)

    # 1) masked path (f32)
    out = jax.block_until_ready(additive_attention(embeddings, W, bias, w_q, mask))
    ref = additive_attention_ref(embeddings, W, bias, w_q, mask)
    assert out.shape == (B, D)
    assert jnp.allclose(out, ref, atol=1e-3, rtol=1e-3), "mismatch vs reference (masked)"

    # 2) mask=None path (no mask tensor DMA'd at all)
    out_nm = jax.block_until_ready(additive_attention(embeddings, W, bias, w_q, None))
    ref_nm = additive_attention_ref(embeddings, W, bias, w_q, None)
    assert jnp.allclose(out_nm, ref_nm, atol=1e-3, rtol=1e-3), "mismatch vs reference (no mask)"

    # 3) ragged sequence length (S % 8 != 0): exercises in-kernel iota masking
    S2 = 6
    emb_r = jax.random.normal(k_emb, (3, S2, D), dtype=jnp.float32)
    out_r = jax.block_until_ready(additive_attention(emb_r, W, bias, w_q, None))
    ref_r = additive_attention_ref(emb_r, W, bias, w_q, None)
    assert jnp.allclose(out_r, ref_r, atol=1e-3, rtol=1e-3), "mismatch vs reference (ragged S)"

    # 4) multi-step grid with a partial batch edge block + padded mask
    B3, S3 = 10, 12
    emb_g = jax.random.normal(k_w, (B3, S3, D), dtype=jnp.float32)
    mask_g = (jax.random.uniform(k_m, (B3, S3)) > 0.25).astype(jnp.float32)
    out_g = jax.block_until_ready(
        additive_attention(emb_g, W, bias, w_q, mask_g, block_b=8))
    ref_g = additive_attention_ref(emb_g, W, bias, w_q, mask_g)
    assert jnp.allclose(out_g, ref_g, atol=1e-3, rtol=1e-3), "mismatch vs reference (edge block)"

    # 5) bf16 streaming path (native-dtype DMA + bf16 MXU, f32 accumulation)
    emb_bf = embeddings.astype(jnp.bfloat16)
    out_bf = jax.block_until_ready(additive_attention(emb_bf, W, bias, w_q, mask))
    assert out_bf.dtype == jnp.bfloat16
    assert jnp.allclose(out_bf.astype(jnp.float32), ref, atol=3e-2, rtol=3e-2), \
        "mismatch vs reference (bf16)"

    print("KERNEL_OK")
</pallas_src>

<mosaic_0001>
module attributes {stable_mosaic.version = 11 : i64} {
  func.func @kernel(%arg0: i32, %arg1: memref<8x8x32xf32, #tpu.memory_space<vmem>>, %arg2: memref<32x16xf32, #tpu.memory_space<vmem>>, %arg3: memref<1x16xf32, #tpu.memory_space<vmem>>, %arg4: memref<1x16xf32, #tpu.memory_space<vmem>>, %arg5: memref<8x8xf32, #tpu.memory_space<vmem>>, %arg6: memref<8x32xf32, #tpu.memory_space<vmem>>) attributes {dimension_semantics = [#tpu.dimension_semantics<parallel>], iteration_bounds = array<i64: 1>, scalar_prefetch = 0 : i64, scratch_operands = 0 : i64, tpu.core_type = #tpu.core_type<tc>, window_params = [{transform_indices = @transform_0, window_bounds = array<i64: 8, 8, 32>}, {pipeline_mode = #tpu.pipeline_mode<synchronous>, transform_indices = @transform_1, window_bounds = array<i64: 32, 16>}, {pipeline_mode = #tpu.pipeline_mode<synchronous>, transform_indices = @transform_2, window_bounds = array<i64: 1, 16>}, {pipeline_mode = #tpu.pipeline_mode<synchronous>, transform_indices = @transform_3, window_bounds = array<i64: 1, 16>}, {transform_indices = @transform_4, window_bounds = array<i64: 8, 8>}, {transform_indices = @transform_5, window_bounds = array<i64: 8, 32>}]} {
    %c0 = arith.constant 0 : index
    %c0_0 = arith.constant 0 : index
    %c0_1 = arith.constant 0 : index
    %0 = vector.load %arg1[%c0, %c0_0, %c0_1] : memref<8x8x32xf32, #tpu.memory_space<vmem>>, vector<8x8x32xf32>
    %1 = vector.shape_cast %0 : vector<8x8x32xf32> to vector<64x32xf32>
    %c0_2 = arith.constant 0 : index
    %c0_3 = arith.constant 0 : index
    %2 = vector.load %arg2[%c0_2, %c0_3] : memref<32x16xf32, #tpu.memory_space<vmem>>, vector<32x16xf32>
    %cst = arith.constant dense<0.000000e+00> : vector<64x16xf32>
    %3 = tpu.matmul %1, %2, %cst {dimension_numbers = #tpu.dot_dimension_numbers<[1], [0], [0], [1], [0, 0, 1, 1], [], []>} : vector<64x32xf32>, vector<32x16xf32>, vector<64x16xf32> -> vector<64x16xf32>
    %c0_4 = arith.constant 0 : index
    %c0_5 = arith.constant 0 : index
    %4 = vector.load %arg3[%c0_4, %c0_5] : memref<1x16xf32, #tpu.memory_space<vmem>>, vector<1x16xf32>
    %5 = vector.broadcast %4 : vector<1x16xf32> to vector<64x16xf32>
    %6 = arith.addf %3, %5 : vector<64x16xf32>
    %7 = math.tanh %6 : vector<64x16xf32>
    %c0_6 = arith.constant 0 : index
    %c0_7 = arith.constant 0 : index
    %8 = vector.load %arg4[%c0_6, %c0_7] : memref<1x16xf32, #tpu.memory_space<vmem>>, vector<1x16xf32>
    %9 = vector.broadcast %8 : vector<1x16xf32> to vector<64x16xf32>
    %10 = arith.mulf %7, %9 : vector<64x16xf32>
    %11 = vector.shape_cast %10 : vector<64x16xf32> to vector<8x8x16xf32>
    %cst_8 = arith.constant dense<0.000000e+00> : vector<8x8xf32>
    %12 = vector.multi_reduction <add>, %11, %cst_8 [2] : vector<8x8x16xf32> to vector<8x8xf32>
    %c0_9 = arith.constant 0 : index
    %c0_10 = arith.constant 0 : index
    %13 = vector.load %arg5[%c0_9, %c0_10] : memref<8x8xf32, #tpu.memory_space<vmem>>, vector<8x8xf32>
    %cst_11 = arith.constant 0.000000e+00 : f32
    %14 = vector.broadcast %cst_11 : f32 to vector<8x8xf32>
    %15 = arith.cmpf oeq, %13, %14 : vector<8x8xf32>
    %cst_12 = arith.constant -1.000000e+10 : f32
    %16 = vector.broadcast %cst_12 : f32 to vector<8x8xf32>
    %17 = arith.select %15, %16, %12 : vector<8x8xi1>, vector<8x8xf32>
    %cst_13 = arith.constant dense<0xFF800000> : vector<8xf32>
    %18 = vector.multi_reduction <maximumf>, %17, %cst_13 [1] : vector<8x8xf32> to vector<8xf32>
    %19 = vector.shape_cast %18 : vector<8xf32> to vector<8x1xf32>
    %20 = vector.broadcast %19 : vector<8x1xf32> to vector<8x8xf32>
    %21 = arith.subf %17, %20 : vector<8x8xf32>
    %22 = math.exp %21 : vector<8x8xf32>
    %cst_14 = arith.constant dense<0.000000e+00> : vector<8xf32>
    %23 = vector.multi_reduction <add>, %22, %cst_14 [1] : vector<8x8xf32> to vector<8xf32>
    %24 = vector.shape_cast %23 : vector<8xf32> to vector<8x1xf32>
    %cst_15 = arith.constant 1.000000e+00 : f32
    %25 = vector.broadcast %cst_15 : f32 to vector<8x1xf32>
    %26 = arith.divf %25, %24 : vector<8x1xf32>
    %27 = vector.broadcast %26 : vector<8x1xf32> to vector<8x8xf32>
    %28 = arith.mulf %22, %27 : vector<8x8xf32>
    %29 = vector.shape_cast %28 : vector<8x8xf32> to vector<8x8x1xf32>
    %30 = vector.broadcast %29 : vector<8x8x1xf32> to vector<8x8x32xf32>
    %31 = arith.mulf %0, %30 : vector<8x8x32xf32>
    %cst_16 = arith.constant dense<0.000000e+00> : vector<8x32xf32>
    %32 = vector.multi_reduction <add>, %31, %cst_16 [1] : vector<8x8x32xf32> to vector<8x32xf32>
    %c0_17 = arith.constant 0 : index
    %c0_18 = arith.constant 0 : index
    %33 = vector.load %arg6[%c0_17, %c0_18] : memref<8x32xf32, #tpu.memory_space<vmem>>, vector<8x32xf32>
    tpu.vector_store %arg6[%c0_17, %c0_18], %32 {strides = array<i32>} : memref<8x32xf32, #tpu.memory_space<vmem>>, vector<8x32xf32>,
    return
  }
  func.func @transform_0(%arg0: i32) -> (i32, i32, i32) {
    %c0_i32 = arith.constant 0 : i32
    %c0_i32_0 = arith.constant 0 : i32
    %c0_i32_1 = arith.constant 0 : i32
    return %arg0, %c0_i32, %c0_i32_0 : i32, i32, i32
  }
  func.func @transform_1(%arg0: i32) -> (i32, i32) {
    %c0_i32 = arith.constant 0 : i32
    %c0_i32_0 = arith.constant 0 : i32
    %c0_i32_1 = arith.constant 0 : i32
    return %c0_i32, %c0_i32_0 : i32, i32
  }
  func.func @transform_2(%arg0: i32) -> (i32, i32) {
    %c0_i32 = arith.constant 0 : i32
    %c0_i32_0 = arith.constant 0 : i32
    %c0_i32_1 = arith.constant 0 : i32
    return %c0_i32, %c0_i32_0 : i32, i32
  }
  func.func @transform_3(%arg0: i32) -> (i32, i32) {
    %c0_i32 = arith.constant 0 : i32
    %c0_i32_0 = arith.constant 0 : i32
    %c0_i32_1 = arith.constant 0 : i32
    return %c0_i32, %c0_i32_0 : i32, i32
  }
  func.func @transform_4(%arg0: i32) -> (i32, i32) {
    %c0_i32 = arith.constant 0 : i32
    %c0_i32_0 = arith.constant 0 : i32
    return %arg0, %c0_i32 : i32, i32
  }
  func.func @transform_5(%arg0: i32) -> (i32, i32) {
    %c0_i32 = arith.constant 0 : i32
    %c0_i32_0 = arith.constant 0 : i32
    return %arg0, %c0_i32 : i32, i32
  }
}

</mosaic_0001>

<llo_original>
// kernel: tpu_custom_call.1
$region0: #{tpu_custom_call.1}
  #allocation0 [shape = 'u32[]', space=smem, size = 0x4, offset = 0x4, fixed_abs, tag = 'smem constant byte address 0x4 - core index']
  #allocation1 [shape = 'u32[144,128]{1,0:T(1,128)}', space=vmem, size = 0x12000, scoped, tag = 'internal scratch']
  %s0 = inlined_call_operand.vmem [shape: f32[2,8,32], index: 0, kind: input, shape index: {}]
  %s1 = inlined_call_operand.vmem [shape: f32[32,16], index: 1, kind: input, shape index: {}]
  %s2 = inlined_call_operand.vmem [shape: f32[1,16], index: 2, kind: input, shape index: {}]
  %s3 = inlined_call_operand.vmem [shape: f32[1,16], index: 3, kind: input, shape index: {}]
  %s4 = inlined_call_operand.vmem [shape: f32[2,8], index: 4, kind: input, shape index: {}]
  %s5 = inlined_call_operand.hbm [shape: f32[2,32], index: 5, kind: output, shape index: {}]
  %s6 = sld [smem:[#allocation0]]
  $region30: #{tpu_custom_call.1} parent=0
    _
  %s8 = ssub.s32 1, %s6
  %s9 = scalar_select 0, %s8, %s6
  $region1: #{tpu_custom_call.1} parent=0
    #allocation2 [shape = 'u8[4096]{0}', space=vmem, size = 0x1000, scoped, tag = 'output window, operand 0, single buffered']
    #allocation3 [shape = 's32[1]{0}', space=sflag, size = 0x4, scoped, tag = 'scoped memory for tpu_custom_call.1']
    %10 = vsyncpa [#allocation3], 0
    // Predicated region
    $region2: #{tpu_custom_call.1} parent=1 // pred_check
      _
    $region3: #{tpu_custom_call.1} parent=1 // pred_check_branch
      %12 = sbr.rel (0) target = $region5
    $region4: #{tpu_custom_call.1} parent=1 // pred_region
      _
    $region5: #{tpu_custom_call.1} parent=1 // pred_fallthru
      _
    // Predicated region
    $region6: #{tpu_custom_call.1} parent=1 // pred_check
      _
    $region7: #{tpu_custom_call.1} parent=1 // pred_check_branch
      %14 = sbr.rel (0) target = $region9
    $region8: #{tpu_custom_call.1} parent=1 // pred_region
      _
    $region9: #{tpu_custom_call.1} parent=1 // pred_fallthru
      _
    // Predicated region
    $region10: #{tpu_custom_call.1} parent=1 // pred_check
      _
    $region11: #{tpu_custom_call.1} parent=1 // pred_check_branch
      %16 = sbr.rel (0) target = $region13
    $region12: #{tpu_custom_call.1} parent=1 // pred_region
      _
    $region13: #{tpu_custom_call.1} parent=1 // pred_fallthru
      _
    // Predicated region
    $region14: #{tpu_custom_call.1} parent=1 // pred_check
      _
    $region15: #{tpu_custom_call.1} parent=1 // pred_check_branch
      %18 = sbr.rel (0) target = $region17
    $region16: #{tpu_custom_call.1} parent=1 // pred_region
      _
    $region17: #{tpu_custom_call.1} parent=1 // pred_fallthru
      _
    // Predicated region
    $region18: #{tpu_custom_call.1} parent=1 // pred_check
      _
    $region19: #{tpu_custom_call.1} parent=1 // pred_check_branch
      %20 = sbr.rel (0) target = $region21
    $region20: #{tpu_custom_call.1} parent=1 // pred_region
      _
    $region21: #{tpu_custom_call.1} parent=1 // pred_fallthru
      _
    %v21 = vld [vmem:[%s0] sm:$0xff]
    %v22 = vld [vmem:[%s0 + $0x8] sm:$0xff]
    %v23 = vld [vmem:[%s0 + $0x10] sm:$0xff]
    %v24 = vld [vmem:[%s0 + $0x18] sm:$0xff]
    %v25 = vld [vmem:[%s0 + $0x20] sm:$0xff]
    %v26 = vld [vmem:[%s0 + $0x28] sm:$0xff]
    %v27 = vld [vmem:[%s0 + $0x30] sm:$0xff]
    %v28 = vld [vmem:[%s0 + $0x38] sm:$0xff]
    %v29 = vld [vmem:[%s1] sm:$0xff]
    %v30 = vld [vmem:[%s1 + $0x8] sm:$0xff]
    %v31 = vld [vmem:[%s1 + $0x10] sm:$0xff]
    %v32 = vld [vmem:[%s1 + $0x18] sm:$0xff]
    %v33 = vld [vmem:[%s2] sm:$0x1]
    %v35 = vlaneseq
    %v36 = vshrl.u32 %v35, 7
    %v37 = vsub.s32 0, %v36
    %v38 = vrot.slane %v33, %v37
    %vm40 = vcmask 261120
    %v42 = vsel %vm40, %v21, 0
    %v45 = vsel %vm40, %v22, 0
    %v48 = vsel %vm40, %v23, 0
    %v51 = vsel %vm40, %v24, 0
    %v54 = vsel %vm40, %v25, 0
    %v57 = vsel %vm40, %v26, 0
    %v60 = vsel %vm40, %v27, 0
    %v63 = vsel %vm40, %v28, 0
    %65 = vmatprep.subr.mxu0 0.0
    %66 = vmatpush1.msra.mxu0 0.0
    %67 = vmatprep.subr.mxu0 0.0
    %68 = vmatpush1.msra.mxu0 0.0
    %69 = vmatprep.subr.mxu0 0.0
    %70 = vmatpush1.msra.mxu0 0.0
    %71 = vmatprep.subr.mxu0 0.0
    %72 = vmatpush1.msra.mxu0 0.0
    %73 = vmatprep.subr.mxu0 0.0
    %74 = vmatpush1.msra.mxu0 0.0
    %75 = vmatprep.subr.mxu0 0.0
    %76 = vmatpush1.msra.mxu0 0.0
    %77 = vmatprep.subr.mxu0 0.0
    %78 = vmatpush1.msra.mxu0 0.0
    %79 = vmatprep.subr.mxu0 0.0
    %80 = vmatpush1.msra.mxu0 0.0
    %81 = vmatprep.subr.mxu0 0.0
    %82 = vmatpush1.msra.mxu0 0.0
    %83 = vmatprep.subr.mxu0 0.0
    %84 = vmatpush1.msra.mxu0 0.0
    %85 = vmatprep.subr.mxu0 0.0
    %86 = vmatpush1.msra.mxu0 0.0
    %87 = vmatprep.subr.mxu0 0.0
    %88 = vmatpush1.msra.mxu0 0.0
    %89 = vmatprep.subr.mxu0 0.0
    %90 = vmatpush1.msra.mxu0 %v32
    %91 = vmatprep.subr.mxu0 0.0
    %92 = vmatpush1.msra.mxu0 %v31
    %93 = vmatprep.subr.mxu0 0.0
    %94 = vmatpush1.msra.mxu0 %v30
    %95 = vmatprep.subr.mxu0 0.0
    %96 = vmatpush1.msra.mxu0 %v29
    %97 = vmatprep.subr.mxu0 0.0
    %98 = vmatpush2.msra.mxu0 0.0
    %99 = vmatprep.subr.mxu0 0.0
    %100 = vmatpush2.msra.mxu0 0.0
    %101 = vmatprep.subr.mxu0 0.0
    %102 = vmatpush2.msra.mxu0 0.0
    %103 = vmatprep.subr.mxu0 0.0
    %104 = vmatpush2.msra.mxu0 0.0
    %105 = vmatprep.subr.mxu0 0.0
    %106 = vmatpush2.msra.mxu0 0.0
    %107 = vmatprep.subr.mxu0 0.0
    %108 = vmatpush2.msra.mxu0 0.0
    %109 = vmatprep.subr.mxu0 0.0
    %110 = vmatpush2.msra.mxu0 0.0
    %111 = vmatprep.subr.mxu0 0.0
    %112 = vmatpush2.msra.mxu0 0.0
    %113 = vmatprep.subr.mxu0 0.0
    %114 = vmatpush2.msra.mxu0 0.0
    %115 = vmatprep.subr.mxu0 0.0
    %116 = vmatpush2.msra.mxu0 0.0
    %117 = vmatprep.subr.mxu0 0.0
    %118 = vmatpush2.msra.mxu0 0.0
    %119 = vmatprep.subr.mxu0 0.0
    %120 = vmatpush2.msra.mxu0 0.0
    %121 = vmatprep.subr.mxu0 0.0
    %122 = vmatpush2.msra.mxu0 0.0
    %123 = vmatprep.subr.mxu0 0.0
    %124 = vmatpush2.msra.mxu0 0.0
    %125 = vmatprep.subr.mxu0 0.0
    %126 = vmatpush2.msra.mxu0 0.0
    %127 = vmatprep.subr.mxu0 0.0
    %128 = vmatpush2.msra.mxu0 0.0
    %129 = vmatprep.mubr.f32.mxu0 0.0
    %130 = vmatmul.mubr.f32.gmra.mxu0 %v42
    %v131 = vpop.f32.mrf.mxu0
    %v132 = vadd.f32 %v38, %v131
    %v133 = vpop.f32.mrf.mxu0
    %134 = vmatprep.mubr.f32.mxu0 0.0
    %135 = vmatmul.mubr.f32.gmra.mxu0 %v45
    %v136 = vpop.f32.mrf.mxu0
    %v137 = vadd.f32 %v38, %v136
    %v138 = vpop.f32.mrf.mxu0
    %139 = vmatprep.mubr.f32.mxu0 0.0
    %140 = vmatmul.mubr.f32.gmra.mxu0 %v48
    %v141 = vpop.f32.mrf.mxu0
    %v142 = vadd.f32 %v38, %v141
    %v143 = vpop.f32.mrf.mxu0
    %144 = vmatprep.mubr.f32.mxu0 0.0
    %145 = vmatmul.mubr.f32.gmra.mxu0 %v51
    %v146 = vpop.f32.mrf.mxu0
    %v147 = vadd.f32 %v38, %v146
    %v148 = vpop.f32.mrf.mxu0
    %149 = vmatprep.mubr.f32.mxu0 0.0
    %150 = vmatmul.mubr.f32.gmra.mxu0 %v54
    %v151 = vpop.f32.mrf.mxu0
    %v152 = vadd.f32 %v38, %v151
    %v153 = vpop.f32.mrf.mxu0
    %154 = vmatprep.mubr.f32.mxu0 0.0
    %155 = vmatmul.mubr.f32.gmra.mxu0 %v57
    %v156 = vpop.f32.mrf.mxu0
    %v157 = vadd.f32 %v38, %v156
    %v158 = vpop.f32.mrf.mxu0
    %159 = vmatprep.mubr.f32.mxu0 0.0
    %160 = vmatmul.mubr.f32.gmra.mxu0 %v60
    %v161 = vpop.f32.mrf.mxu0
    %v162 = vadd.f32 %v38, %v161
    %v163 = vpop.f32.mrf.mxu0
    %164 = vmatprep.mubr.f32.mxu0 0.0
    %165 = vmatmul.mubr.f32.gmra.mxu0 %v63
    %v166 = vpop.f32.mrf.mxu0
    %v167 = vadd.f32 %v38, %v166
    %v168 = vpop.f32.mrf.mxu0
    %169 = vdwg.mxu0
    %v170 = vtanh.pop %v132
    %v171 = vtanh.pop %v137
    %v172 = vtanh.pop %v142
    %v173 = vtanh.pop %v147
    %v174 = vtanh.pop %v152
    %v175 = vtanh.pop %v157
    %v176 = vtanh.pop %v162
    %v177 = vtanh.pop %v167
    %v178 = vld [vmem:[%s3] sm:$0x1]
    %v180 = vlaneseq
    %v181 = vshrl.u32 %v180, 7
    %v182 = vsub.s32 0, %v181
    %v183 = vrot.slane %v178, %v182
    %v185 = vmul.f32 %v170, %v183
    %v186 = vmul.f32 %v171, %v183
    %v187 = vmul.f32 %v172, %v183
    %v188 = vmul.f32 %v173, %v183
    %v189 = vmul.f32 %v174, %v183
    %v190 = vmul.f32 %v175, %v183
    %v191 = vmul.f32 %v176, %v183
    %v192 = vmul.f32 %v177, %v183
    %vm193 = vcmask 130048
    %v194 = vsel %vm193, %v185, 0.0
    %195 = vadd.xlane.f32.xlu0 %v194
    %v196 = vpop.xlane.xlu0 %195
    %v197 = vsel %vm193, %v186, 0.0
    %198 = vadd.xlane.f32.xlu0 %v197
    %v199 = vpop.xlane.xlu0 %198
    %v200 = vsel %vm193, %v187, 0.0
    %201 = vadd.xlane.f32.xlu0 %v200
    %v202 = vpop.xlane.xlu0 %201
    %v203 = vsel %vm193, %v188, 0.0
    %204 = vadd.xlane.f32.xlu0 %v203
    %v205 = vpop.xlane.xlu0 %204
    %v206 = vsel %vm193, %v189, 0.0
    %207 = vadd.xlane.f32.xlu0 %v206
    %v208 = vpop.xlane.xlu0 %207
    %v209 = vsel %vm193, %v190, 0.0
    %210 = vadd.xlane.f32.xlu0 %v209
    %v211 = vpop.xlane.xlu0 %210
    %v212 = vsel %vm193, %v191, 0.0
    %213 = vadd.xlane.f32.xlu0 %v212
    %v214 = vpop.xlane.xlu0 %213
    %v215 = vsel %vm193, %v192, 0.0
    %216 = vadd.xlane.f32.xlu0 %v215
    %v217 = vpop.xlane.xlu0 %216
    %v218 = vld [vmem:[%s4] sm:$0xff]
    %vm219 = vcmp.eq.f32.partialorder %v218, 0.0
    %v228 = vlaneseq
    %v229 = vand.u32 %v228, 127
    %v230 = vlaneseq
    %v231 = vshrl.u32 %v230, 7
    %v232 = vsub.s32 %v229, %v231
    %v233 = vrot.slane %v196, %v232
    %v234 = vlaneseq
    %v235 = vshrl.u32 %v234, 7
    %v236 = vsub.s32 %v229, %v235
    %v237 = vrot.slane %v199, %v236
    %v238 = vlaneseq
    %v239 = vshrl.u32 %v238, 7
    %v240 = vsub.s32 %v229, %v239
    %v241 = vrot.slane %v202, %v240
    %v242 = vlaneseq
    %v243 = vshrl.u32 %v242, 7
    %v244 = vsub.s32 %v229, %v243
    %v245 = vrot.slane %v205, %v244
    %v246 = vlaneseq
    %v247 = vshrl.u32 %v246, 7
    %v248 = vsub.s32 %v229, %v247
    %v249 = vrot.slane %v208, %v248
    %v250 = vlaneseq
    %v251 = vshrl.u32 %v250, 7
    %v252 = vsub.s32 %v229, %v251
    %v253 = vrot.slane %v211, %v252
    %v254 = vlaneseq
    %v255 = vshrl.u32 %v254, 7
    %v256 = vsub.s32 %v229, %v255
    %v257 = vrot.slane %v214, %v256
    %v258 = vlaneseq
    %v259 = vshrl.u32 %v258, 7
    %v260 = vsub.s32 %v229, %v259
    %v261 = vrot.slane %v217, %v260
    %vm262 = vcmask 1041409
    %v263 = vsel %vm262, %v237, %v233
    %vm264 = vcmask 1042434
    %v265 = vsel %vm264, %v241, %v263
    %vm266 = vcmask 1043459
    %v267 = vsel %vm266, %v245, %v265
    %vm268 = vcmask 1044484
    %v269 = vsel %vm268, %v249, %v267
    %vm270 = vcmask 1045509
    %v271 = vsel %vm270, %v253, %v269
    %vm272 = vcmask 1046534
    %v273 = vsel %vm272, %v257, %v271
    %vm274 = vcmask 1047559
    %v275 = vsel %vm274, %v261, %v273
    %v277 = vsel %vm219, -1e+10, %v275
    %vm278 = vcmask 64512
    %v279 = vsel %vm278, %v277, -inf
    %280 = vmax.xlane.f32.xlu0 %v279
    %v281 = vpop.xlane.xlu0 %280
    %v282 = vsub.f32 %v277, %v281
    %v283 = vmul.f32 %v282, 1.442695
    %v284 = vpow.pop %v283
    %v285 = vsel %vm278, %v284, 0.0
    %286 = vadd.xlane.f32.xlu0 %v285
    %v287 = vpop.xlane.xlu0 %286
    %v288 = vrcp.pop %v287
    %v289 = vmul.f32 1.0, %v288
    %v290 = vmul.f32 %v284, %v289
    %v291 = vlaneseq
    %v292 = vshrl.u32 %v291, 7
    %v293 = vsub.s32 0, %v292
    %v294 = vrot.slane %v290, %v293
    %296 = vbcast.lane.b32.xlu0 %v294, 256
    %v297 = vpop.permute.xlu0 %296
    %v298 = vlaneseq
    %v299 = vshrl.u32 %v298, 7
    %v300 = vsub.s32 1, %v299
    %v301 = vrot.slane %v290, %v300
    %303 = vbcast.lane.b32.xlu0 %v301, 256
    %v304 = vpop.permute.xlu0 %303
    %v305 = vlaneseq
    %v306 = vshrl.u32 %v305, 7
    %v307 = vsub.s32 2, %v306
    %v308 = vrot.slane %v290, %v307
    %310 = vbcast.lane.b32.xlu0 %v308, 256
    %v311 = vpop.permute.xlu0 %310
    %v312 = vlaneseq
    %v313 = vshrl.u32 %v312, 7
    %v314 = vsub.s32 3, %v313
    %v315 = vrot.slane %v290, %v314
    %317 = vbcast.lane.b32.xlu0 %v315, 256
    %v318 = vpop.permute.xlu0 %317
    %v319 = vlaneseq
    %v320 = vshrl.u32 %v319, 7
    %v321 = vsub.s32 4, %v320
    %v322 = vrot.slane %v290, %v321
    %324 = vbcast.lane.b32.xlu0 %v322, 256
    %v325 = vpop.permute.xlu0 %324
    %v326 = vlaneseq
    %v327 = vshrl.u32 %v326, 7
    %v328 = vsub.s32 5, %v327
    %v329 = vrot.slane %v290, %v328
    %331 = vbcast.lane.b32.xlu0 %v329, 256
    %v332 = vpop.permute.xlu0 %331
    %v333 = vlaneseq
    %v334 = vshrl.u32 %v333, 7
    %v335 = vsub.s32 6, %v334
    %v336 = vrot.slane %v290, %v335
    %338 = vbcast.lane.b32.xlu0 %v336, 256
    %v339 = vpop.permute.xlu0 %338
    %v340 = vlaneseq
    %v341 = vshrl.u32 %v340, 7
    %v342 = vsub.s32 7, %v341
    %v343 = vrot.slane %v290, %v342
    %345 = vbcast.lane.b32.xlu0 %v343, 256
    %v346 = vpop.permute.xlu0 %345
    %v347 = vmul.f32 %v21, %v297
    %v348 = vmul.f32 %v22, %v304
    %v349 = vmul.f32 %v23, %v311
    %v350 = vmul.f32 %v24, %v318
    %v351 = vmul.f32 %v25, %v325
    %v352 = vmul.f32 %v26, %v332
    %v353 = vmul.f32 %v27, %v339
    %v354 = vmul.f32 %v28, %v346
    %v355 = vsel %vm40, %v347, 0.0
    %v356 = vrot.slane %v355, 4
    %v357 = vadd.f32 %v355, %v356
    %v358 = vrot.slane %v357, 2
    %v359 = vadd.f32 %v357, %v358
    %v360 = vrot.slane %v359, 1
    %v361 = vadd.f32 %v359, %v360
    %v362 = vsel %vm40, %v348, 0.0
    %v363 = vrot.slane %v362, 4
    %v364 = vadd.f32 %v362, %v363
    %v365 = vrot.slane %v364, 2
    %v366 = vadd.f32 %v364, %v365
    %v367 = vrot.slane %v366, 1
    %v368 = vadd.f32 %v366, %v367
    %v369 = vsel %vm40, %v349, 0.0
    %v370 = vrot.slane %v369, 4
    %v371 = vadd.f32 %v369, %v370
    %v372 = vrot.slane %v371, 2
    %v373 = vadd.f32 %v371, %v372
    %v374 = vrot.slane %v373, 1
    %v375 = vadd.f32 %v373, %v374
    %v376 = vsel %vm40, %v350, 0.0
    %v377 = vrot.slane %v376, 4
    %v378 = vadd.f32 %v376, %v377
    %v379 = vrot.slane %v378, 2
    %v380 = vadd.f32 %v378, %v379
    %v381 = vrot.slane %v380, 1
    %v382 = vadd.f32 %v380, %v381
    %v383 = vsel %vm40, %v351, 0.0
    %v384 = vrot.slane %v383, 4
    %v385 = vadd.f32 %v383, %v384
    %v386 = vrot.slane %v385, 2
    %v387 = vadd.f32 %v385, %v386
    %v388 = vrot.slane %v387, 1
    %v389 = vadd.f32 %v387, %v388
    %v390 = vsel %vm40, %v352, 0.0
    %v391 = vrot.slane %v390, 4
    %v392 = vadd.f32 %v390, %v391
    %v393 = vrot.slane %v392, 2
    %v394 = vadd.f32 %v392, %v393
    %v395 = vrot.slane %v394, 1
    %v396 = vadd.f32 %v394, %v395
    %v397 = vsel %vm40, %v353, 0.0
    %v398 = vrot.slane %v397, 4
    %v399 = vadd.f32 %v397, %v398
    %v400 = vrot.slane %v399, 2
    %v401 = vadd.f32 %v399, %v400
    %v402 = vrot.slane %v401, 1
    %v403 = vadd.f32 %v401, %v402
    %v404 = vsel %vm40, %v354, 0.0
    %v405 = vrot.slane %v404, 4
    %v406 = vadd.f32 %v404, %v405
    %v407 = vrot.slane %v406, 2
    %v408 = vadd.f32 %v406, %v407
    %v409 = vrot.slane %v408, 1
    %v410 = vadd.f32 %v408, %v409
    %v419 = vsel %vm262, %v368, %v361
    %v420 = vsel %vm264, %v375, %v419
    %v421 = vsel %vm266, %v382, %v420
    %v422 = vsel %vm268, %v389, %v421
    %v423 = vsel %vm270, %v396, %v422
    %v424 = vsel %vm272, %v403, %v423
    %v425 = vsel %vm274, %v410, %v424
    %427 = vst.msk [vmem:[#allocation2] sm:$0xff] %vm40, %v425
    // Predicated region
    $region22: #{tpu_custom_call.1} parent=1 // pred_check
      _
    $region23: #{tpu_custom_call.1} parent=1 // pred_check_branch
      %429 = sbr.rel (0) target = $region25
    $region24: #{tpu_custom_call.1} parent=1 // pred_region
      %s431 = ssub.s32 128, 32
      %432 = vsyncadd [#allocation3], %s431
      %s433 = sshll.u32 [#allocation2], 4
      %s434 = int_to_ptr.vmem [resolvable:$true] %s433
      %439 = dma.vmem_to_hbm [thread:$0]  %s434, 32, %s5, [#allocation3], 32, 32, 2
    $region25: #{tpu_custom_call.1} parent=1 // pred_fallthru
      _
    // Predicated region
    $region26: #{tpu_custom_call.1} parent=1 // pred_check
      _
    $region27: #{tpu_custom_call.1} parent=1 // pred_check_branch
      %441 = sbr.rel (0) target = $region29
    $region28: #{tpu_custom_call.1} parent=1 // pred_region
      %442 = dma.done [#allocation3], 128
    $region29: #{tpu_custom_call.1} parent=1 // pred_fallthru
      _
    %443 = vsyncpa [#allocation3], 1

</llo_original>
